<compile_context>
chip_gen: v7x
topology: tpu7x:2x2x1
jax: 0.10.0
libtpu: 0.0.40
codegen_flags: <defaults>
</compile_context>

<pallas_src>
import math

import numpy as np

import jax
import jax.numpy as jnp
from jax.experimental import pallas as pl
from jax.experimental.pallas import tpu as pltpu


def _pos_enc_kernel(nl_ref, freqs_ref, phase_ref, out_ref):
    # nl_ref   : (tile_b, 1)    input dtype
    # freqs_ref: (1, dim)       f32, [f_0..f_{c-1}, f_0..f_{c-1}]
    # phase_ref: (1, dim)       f32, [0..0, pi/2..pi/2]
    # out_ref  : (tile_b, dim)
    #
    # cos(x) == sin(x + pi/2): one lane-dense store per tile instead of two
    # masked half-width stores.
    enc = nl_ref[...].astype(jnp.float32) * freqs_ref[...] + phase_ref[...]
    out_ref[...] = jnp.sin(enc).astype(out_ref.dtype)


def _choose_tile_b(B: int, dim: int, out_itemsize: int,
                   tile_bytes_budget: int = 8 << 20) -> int:
    """Batch tile: byte-capped (~8 MiB output tile), multiple of 8 (or == B)."""
    bytes_per_row = max(1, dim * out_itemsize)
    rows_cap = max(8, (tile_bytes_budget // bytes_per_row) // 8 * 8)
    if B <= rows_cap:
        if B >= 16:
            # Whole batch fits in one tile: split into >=2 tiles so the
            # "parallel" grid axis can shard across both TensorCores (v7x).
            half = ((B + 1) // 2 + 7) // 8 * 8
            return min(half, rows_cap)
        return B  # tiny batch: single block equal to the full array extent
    return rows_cap


def positional_encoding(noise_level: jax.Array, dim: int) -> jax.Array:
    """noise_level: (B,) -> (B, dim) sinusoidal encoding."""
    assert dim % 2 == 0, "dim must be even"
    B = noise_level.shape[0]
    count = dim // 2
    out_dtype = noise_level.dtype

    # Tiny feature dims: >=75% of every vreg lane / VALU op / store would be
    # dead inside a standalone pallas_call; let XLA fuse it instead.
    if dim < 128 or B == 0:
        step = jnp.arange(count, dtype=jnp.float32) / float(count)
        enc = (noise_level.astype(jnp.float32)[:, None]
               * jnp.exp(-math.log(10000.0) * step)[None, :])
        return jnp.concatenate([jnp.sin(enc), jnp.cos(enc)],
                               axis=-1).astype(out_dtype)

    # Hoisted constant tables (numpy -> literal constants, f32 throughout).
    step_np = np.arange(count, dtype=np.float32) / np.float32(count)
    freqs_half = np.exp(-np.float32(math.log(10000.0)) * step_np).astype(np.float32)
    freqs_full = jnp.asarray(
        np.concatenate([freqs_half, freqs_half]).reshape(1, dim))
    phase = jnp.asarray(
        np.concatenate([np.zeros(count, np.float32),
                        np.full(count, np.pi / 2.0, np.float32)]).reshape(1, dim))

    out_itemsize = np.dtype(out_dtype).itemsize
    tile_b = _choose_tile_b(B, dim, out_itemsize)
    num_tiles = pl.cdiv(B, tile_b)

    nl2d = noise_level.reshape(B, 1)

    cost = pl.CostEstimate(
        flops=2 * B * dim,
        transcendentals=B * dim,
        bytes_accessed=B * dim * out_itemsize + B * out_itemsize + 2 * dim * 4,
    )

    return pl.pallas_call(
        _pos_enc_kernel,
        out_shape=jax.ShapeDtypeStruct((B, dim), out_dtype),
        grid=(num_tiles,),
        in_specs=[
            pl.BlockSpec((tile_b, 1), lambda i: (i, 0)),
            pl.BlockSpec((1, dim), lambda i: (0, 0)),
            pl.BlockSpec((1, dim), lambda i: (0, 0)),
        ],
        out_specs=pl.BlockSpec((tile_b, dim), lambda i: (i, 0)),
        compiler_params=pltpu.CompilerParams(
            dimension_semantics=("parallel",),
            vmem_limit_bytes=32 << 20,
        ),
        cost_estimate=cost,
    )(nl2d, freqs_full, phase)


def _reference(noise_level, dim):
    count = dim // 2
    step = jnp.arange(count, dtype=noise_level.dtype) / count
    enc = noise_level[:, None] * jnp.exp(-math.log(10000.0) * step[None, :])
    return jnp.concatenate([jnp.sin(enc), jnp.cos(enc)], axis=-1)


if __name__ == "__main__":
    key = jax.random.PRNGKey(0)
    k1, k2 = jax.random.split(key)

    # Common diffusion shape: per-batch scalar noise level, dim=128.
    B, dim = 16, 128
    noise_level = jax.random.uniform(
        k1, (B,), dtype=jnp.float32, minval=0.01, maxval=1.0)
    out = positional_encoding(noise_level, dim)
    jax.block_until_ready(out)
    ref = _reference(noise_level, dim)
    assert out.shape == (B, dim)
    assert jnp.allclose(out, ref, atol=1e-5, rtol=1e-5), "mismatch vs reference"

    # Ragged final block: B % tile_b != 0, no pad/slice copy in the wrapper.
    B2, dim2 = 27, 256
    noise_level2 = jax.random.uniform(
        k2, (B2,), dtype=jnp.float32, minval=0.01, maxval=1.0)
    out2 = positional_encoding(noise_level2, dim2)
    jax.block_until_ready(out2)
    ref2 = _reference(noise_level2, dim2)
    assert out2.shape == (B2, dim2)
    assert jnp.allclose(out2, ref2, atol=1e-5, rtol=1e-5), "mismatch (ragged)"

    print("KERNEL_OK")
</pallas_src>

<mosaic_0001>
module attributes {stable_mosaic.version = 11 : i64} {
  func.func @_pos_enc_kernel(%arg0: i32, %arg1: memref<8x1xf32, #tpu.memory_space<vmem>>, %arg2: memref<1x128xf32, #tpu.memory_space<vmem>>, %arg3: memref<1x128xf32, #tpu.memory_space<vmem>>, %arg4: memref<8x128xf32, #tpu.memory_space<vmem>>) attributes {dimension_semantics = [#tpu.dimension_semantics<parallel>], iteration_bounds = array<i64: 2>, scalar_prefetch = 0 : i64, scratch_operands = 0 : i64, tpu.core_type = #tpu.core_type<tc>, window_params = [{transform_indices = @transform_0, window_bounds = array<i64: 8, 1>}, {pipeline_mode = #tpu.pipeline_mode<synchronous>, transform_indices = @transform_1, window_bounds = array<i64: 1, 128>}, {pipeline_mode = #tpu.pipeline_mode<synchronous>, transform_indices = @transform_2, window_bounds = array<i64: 1, 128>}, {transform_indices = @transform_3, window_bounds = array<i64: 8, 128>}]} {
    %c0 = arith.constant 0 : index
    %c0_0 = arith.constant 0 : index
    %0 = vector.load %arg1[%c0, %c0_0] : memref<8x1xf32, #tpu.memory_space<vmem>>, vector<8x1xf32>
    %c0_1 = arith.constant 0 : index
    %c0_2 = arith.constant 0 : index
    %1 = vector.load %arg2[%c0_1, %c0_2] : memref<1x128xf32, #tpu.memory_space<vmem>>, vector<1x128xf32>
    %2 = vector.broadcast %0 : vector<8x1xf32> to vector<8x128xf32>
    %3 = vector.broadcast %1 : vector<1x128xf32> to vector<8x128xf32>
    %4 = arith.mulf %2, %3 : vector<8x128xf32>
    %c0_3 = arith.constant 0 : index
    %c0_4 = arith.constant 0 : index
    %5 = vector.load %arg3[%c0_3, %c0_4] : memref<1x128xf32, #tpu.memory_space<vmem>>, vector<1x128xf32>
    %6 = vector.broadcast %5 : vector<1x128xf32> to vector<8x128xf32>
    %7 = arith.addf %4, %6 : vector<8x128xf32>
    %8 = math.sin %7 : vector<8x128xf32>
    %c0_5 = arith.constant 0 : index
    %c0_6 = arith.constant 0 : index
    %9 = vector.load %arg4[%c0_5, %c0_6] : memref<8x128xf32, #tpu.memory_space<vmem>>, vector<8x128xf32>
    tpu.vector_store %arg4[%c0_5, %c0_6], %8 {strides = array<i32>} : memref<8x128xf32, #tpu.memory_space<vmem>>, vector<8x128xf32>,
    return
  }
  func.func @transform_0(%arg0: i32) -> (i32, i32) {
    %c0_i32 = arith.constant 0 : i32
    %c0_i32_0 = arith.constant 0 : i32
    return %arg0, %c0_i32 : i32, i32
  }
  func.func @transform_1(%arg0: i32) -> (i32, i32) {
    %c0_i32 = arith.constant 0 : i32
    %c0_i32_0 = arith.constant 0 : i32
    %c0_i32_1 = arith.constant 0 : i32
    return %c0_i32, %c0_i32_0 : i32, i32
  }
  func.func @transform_2(%arg0: i32) -> (i32, i32) {
    %c0_i32 = arith.constant 0 : i32
    %c0_i32_0 = arith.constant 0 : i32
    %c0_i32_1 = arith.constant 0 : i32
    return %c0_i32, %c0_i32_0 : i32, i32
  }
  func.func @transform_3(%arg0: i32) -> (i32, i32) {
    %c0_i32 = arith.constant 0 : i32
    %c0_i32_0 = arith.constant 0 : i32
    return %arg0, %c0_i32 : i32, i32
  }
}

</mosaic_0001>

<llo_original>
// kernel: tpu_custom_call.1
$region0: #{tpu_custom_call.1}
  #allocation0 [shape = 'u32[]', space=smem, size = 0x4, offset = 0x4, fixed_abs, tag = 'smem constant byte address 0x4 - core index']
  #allocation1 [shape = 'u32[144,128]{1,0:T(1,128)}', space=vmem, size = 0x12000, scoped, tag = 'internal scratch']
  %s0 = inlined_call_operand.vmem [shape: f32[16,1], index: 0, kind: input, shape index: {}]
  %s1 = inlined_call_operand.vmem [shape: f32[1,128], index: 1, kind: input, shape index: {}]
  %s2 = inlined_call_operand.vmem [shape: f32[1,128], index: 2, kind: input, shape index: {}]
  %s3 = inlined_call_operand.hbm [shape: f32[16,128], index: 3, kind: output, shape index: {}]
  %s4 = sld [smem:[#allocation0]]
  $region45: #{tpu_custom_call.1} parent=0
    _
  %s6 = ssub.s32 1, %s4
  %s7 = scalar_select 0, %s6, %s4
  $region1: #{tpu_custom_call.1} parent=0
    #allocation2 [shape = 'u8[8192]{0}', space=vmem, size = 0x2000, scoped, tag = 'output window, operand 0']
    #allocation3 [shape = 's32[2]{0}', space=sflag, size = 0x8, scoped, tag = 'scoped memory for tpu_custom_call.1']
    %8 = vsyncpa [#allocation3], 0
    %s9 = scalar_lea.sflag [#allocation3], 1
    %10 = vsyncpa %s9, 0
    loop: start=0, step=1, limit=4
    $region2: #{tpu_custom_call.1} parent=1 // loop_pre_header
      _
    $region3: #{tpu_custom_call.1} parent=1 // loop_header
      %s12 = sphi 0, %s16
      %p13 = scmp.ge.s32.totalorder %s12, 4
      %s22 = sphi 0, %s24
      %s25 = sphi 0, %s22
      %s26 = sphi 0, %s25
      %s42 = sphi 0, %s26
      %s46 = sphi 0, %s46
      %s48 = sphi 0, %s46
      %s49 = sphi 0, %s48
      %s63 = sphi 0, %s49
      %s67 = sphi 0, %s67
      %s69 = sphi 0, %s67
      %s70 = sphi 0, %s69
      %s84 = sphi 0, %s70
      %s90 = sphi 0, %s92
      %s93 = sphi 0, %s90
      %s94 = sphi 0, %s93
      %s110 = sphi 0, %s94
    $region4: #{tpu_custom_call.1} parent=1 // loop_header_branch
      %15 = sbr.rel (%p13) target = $region8
    $region5: #{tpu_custom_call.1} parent=1 // loop_body
      %s17 = ssub.s32 %s12, 1
      %s18 = ssub.s32 %s12, 2
      %s19 = sadd.s32 %s12, 1
      %s20 = ssub.s32 %s12, %s19
      %p21 = scmp.eq.s32.totalorder %s20, 0
      %s23 = sadd.s32 %s22, 1
      %s24 = scalar_select %p21, %s22, %s23
      %p27 = pneg %p21
      %p28 = scmp.eq.s32.totalorder %s12, 1
      %p29 = por %p27, %p28
      %p30 = scmp.ne.s32.totalorder %s22, %s25
      %p31 = scmp.eq.s32.totalorder %s12, 0
      %p32 = por %p30, %p31
      %p33 = scmp.ne.s32.totalorder %s22, %s25
      %p34 = scmp.eq.s32.totalorder %s17, 1
      %p35 = por %p33, %p34
      %p36 = scmp.ne.s32.totalorder %s25, %s26
      %p37 = scmp.eq.s32.totalorder %s17, 0
      %p38 = por %p36, %p37
      %p39 = scmp.ne.s32.totalorder %s25, %s26
      %p40 = scmp.eq.s32.totalorder %s18, 1
      %p41 = por %p39, %p40
      %p43 = scmp.ne.s32.totalorder %s26, %s42
      %p44 = scmp.eq.s32.totalorder %s18, 0
      %p45 = por %p43, %p44
      %s47 = sadd.s32 %s46, 1
      %p50 = scmp.eq.s32.totalorder %s12, 1
      %p51 = scmp.ne.s32.totalorder %s46, %s48
      %p52 = scmp.eq.s32.totalorder %s12, 0
      %p53 = por %p51, %p52
      %p54 = scmp.ne.s32.totalorder %s46, %s48
      %p55 = scmp.eq.s32.totalorder %s17, 1
      %p56 = por %p54, %p55
      %p57 = scmp.ne.s32.totalorder %s48, %s49
      %p58 = scmp.eq.s32.totalorder %s17, 0
      %p59 = por %p57, %p58
      %p60 = scmp.ne.s32.totalorder %s48, %s49
      %p61 = scmp.eq.s32.totalorder %s18, 1
      %p62 = por %p60, %p61
      %p64 = scmp.ne.s32.totalorder %s49, %s63
      %p65 = scmp.eq.s32.totalorder %s18, 0
      %p66 = por %p64, %p65
      %s68 = sadd.s32 %s67, 1
      %p71 = scmp.eq.s32.totalorder %s12, 1
      %p72 = scmp.ne.s32.totalorder %s67, %s69
      %p73 = scmp.eq.s32.totalorder %s12, 0
      %p74 = por %p72, %p73
      %p75 = scmp.ne.s32.totalorder %s67, %s69
      %p76 = scmp.eq.s32.totalorder %s17, 1
      %p77 = por %p75, %p76
      %p78 = scmp.ne.s32.totalorder %s69, %s70
      %p79 = scmp.eq.s32.totalorder %s17, 0
      %p80 = por %p78, %p79
      %p81 = scmp.ne.s32.totalorder %s69, %s70
      %p82 = scmp.eq.s32.totalorder %s18, 1
      %p83 = por %p81, %p82
      %p85 = scmp.ne.s32.totalorder %s70, %s84
      %p86 = scmp.eq.s32.totalorder %s18, 0
      %p87 = por %p85, %p86
      %s88 = ssub.s32 %s12, %s19
      %p89 = scmp.eq.s32.totalorder %s88, 0
      %s91 = sadd.s32 %s90, 1
      %s92 = scalar_select %p89, %s90, %s91
      %p95 = pneg %p89
      %p96 = scmp.eq.s32.totalorder %s12, 1
      %p97 = por %p95, %p96
      %p98 = scmp.ne.s32.totalorder %s90, %s93
      %p99 = scmp.eq.s32.totalorder %s12, 0
      %p100 = por %p98, %p99
      %p101 = scmp.ne.s32.totalorder %s90, %s93
      %p102 = scmp.eq.s32.totalorder %s17, 1
      %p103 = por %p101, %p102
      %p104 = scmp.ne.s32.totalorder %s93, %s94
      %p105 = scmp.eq.s32.totalorder %s17, 0
      %p106 = por %p104, %p105
      %p107 = scmp.ne.s32.totalorder %s93, %s94
      %p108 = scmp.eq.s32.totalorder %s18, 1
      %p109 = por %p107, %p108
      %p111 = scmp.ne.s32.totalorder %s94, %s110
      %p112 = scmp.eq.s32.totalorder %s18, 0
      %p113 = por %p111, %p112
      %p114 = scmp.le.s32.totalorder 1, %s12
      %p115 = scmp.lt.s32.totalorder %s12, 3
      %p116 = pnand %p114, %p115
      %p117 = pneg %p116
      // Predicated region
      $region9: #{tpu_custom_call.1} parent=5 // pred_check
        _
      $region10: #{tpu_custom_call.1} parent=5 // pred_check_branch
        %119 = sbr.rel (%p116) target = $region12
      $region11: #{tpu_custom_call.1} parent=5 // pred_region
        %s120 = ssub.s32 %s12, 1
        // Predicated region
        $region13: #{tpu_custom_call.1} parent=11 // pred_check
          %p121 = pneg %p59
        $region14: #{tpu_custom_call.1} parent=11 // pred_check_branch
          %123 = sbr.rel (%p121) target = $region16
        $region15: #{tpu_custom_call.1} parent=11 // pred_region
          _
        $region16: #{tpu_custom_call.1} parent=11 // pred_fallthru
          _
        // Predicated region
        $region17: #{tpu_custom_call.1} parent=11 // pred_check
          %p124 = pneg %p80
        $region18: #{tpu_custom_call.1} parent=11 // pred_check_branch
          %126 = sbr.rel (%p124) target = $region20
        $region19: #{tpu_custom_call.1} parent=11 // pred_region
          _
        $region20: #{tpu_custom_call.1} parent=11 // pred_fallthru
          _
      $region12: #{tpu_custom_call.1} parent=5 // pred_fallthru
        _
      %p127 = scmp.lt.s32.totalorder %s12, 2
      // Predicated region
      $region21: #{tpu_custom_call.1} parent=5 // pred_check
        %p128 = pneg %p127
      $region22: #{tpu_custom_call.1} parent=5 // pred_check_branch
        %130 = sbr.rel (%p128) target = $region24
      $region23: #{tpu_custom_call.1} parent=5 // pred_region
        // Predicated region
        $region25: #{tpu_custom_call.1} parent=23 // pred_check
          %p131 = pneg %p32
        $region26: #{tpu_custom_call.1} parent=23 // pred_check_branch
          %133 = sbr.rel (%p131) target = $region28
        $region27: #{tpu_custom_call.1} parent=23 // pred_region
          %p134 = scmp.lt.s32.totalorder %s12, 1
          %s135 = scalar_select %p134, %s12, 1
          %s136 = smul.addr %s135, 8
          %s137 = scalar_lea.vmem %s0, %s136
        $region28: #{tpu_custom_call.1} parent=23 // pred_fallthru
          _
      $region24: #{tpu_custom_call.1} parent=5 // pred_fallthru
        _
      %p138 = scmp.le.s32.totalorder 1, %s12
      %p139 = scmp.lt.s32.totalorder %s12, 3
      %p140 = pnand %p138, %p139
      %p141 = pneg %p140
      // Predicated region
      $region29: #{tpu_custom_call.1} parent=5 // pred_check
        _
      $region30: #{tpu_custom_call.1} parent=5 // pred_check_branch
        %143 = sbr.rel (%p140) target = $region32
      $region31: #{tpu_custom_call.1} parent=5 // pred_region
        %s144 = ssub.s32 %s12, 1
        %p145 = scmp.lt.s32.totalorder %s17, 1
        %s146 = scalar_select %p145, %s17, 1
        %s147 = smul.addr %s146, 8
        %s148 = scalar_lea.vmem %s0, %s147
        %p149 = pneg %p38
        %p150 = pneg %p35
        %p151 = pneg %p59
        %p152 = pneg %p56
        %p153 = pneg %p80
        %p154 = pneg %p77
        %p155 = pneg %p106
        %p156 = pneg %p103
        %s157 = sand.u32 %s93, 1
        %s158 = scalar_lea.sflag [#allocation3], %s157
        %s159 = sand.u32 %s93, 1
        %s160 = smul.addr %s159, 8
        %s161 = scalar_lea.vmem [#allocation2], %s160
        %p162 = scmp.lt.s32.totalorder %s17, 1
        %s163 = scalar_select %p162, %s17, 1
        %s164 = smul.addr %s163, 8
        %s165 = scalar_lea.vmem %s0, %s164
        %v166 = vld [vmem:[%s165] sm:$0xff]
        %v167 = vld [vmem:[%s1] sm:$0x1]
        %169 = vset.pattern.permute.xlu0 0
        %170 = vperm.xlu0 %169, %v166
        %v171 = vpop.permute.xlu0 %170
        %v174 = vlaneseq
        %v175 = vshrl.u32 %v174, 7
        %v176 = vsub.s32 0, %v175
        %v177 = vrot.slane %v167, %v176
        %v179 = vmul.f32 %v171, %v177
        %v180 = vld [vmem:[%s2] sm:$0x1]
        %v182 = vlaneseq
        %v183 = vshrl.u32 %v182, 7
        %v184 = vsub.s32 0, %v183
        %v185 = vrot.slane %v180, %v184
        %v187 = vadd.f32 %v179, %v185
        %v188 = vand.u32 2147483647, %v187
        %vm189 = vcmp.le.f32.partialorder %v188, 0.7853982
        %vm190 = vcmp.lt.s32.totalorder %v187, 0
        %v191 = vand.u32 %v187, 2139095040
        %v192 = vshrl.u32 %v191, 23
        %v193 = vsub.s32 %v192, 127
        %v194 = vand.u32 2147483647, %v187
        %v195 = vand.u32 %v194, 8388607
        %v196 = vor.u32 %v195, 8388608
        %v197 = vsub.s32 0, %v196
        %v198 = vadd.s32 %v193, 1
        %vm199 = vcmp.gt.s32.totalorder %v198, 0
        %v200 = vsel %vm199, %v198, 0
        %v201 = vshrl.u32 %v200, 5
        %v202 = vand.u32 %v200, 31
        %v203 = vsub.s32 32, %v202
        %v204 = vshrl.u32 683565275, %v203
        %v205 = vshll.u32 683565275, %v202
        %v206 = vshrl.u32 2475754826, %v203
        %v207 = vor.u32 %v205, %v206
        %v208 = vshll.u32 2475754826, %v202
        %v209 = vshrl.u32 2131351028, %v203
        %v210 = vor.u32 %v208, %v209
        %v211 = vshll.u32 2131351028, %v202
        %v212 = vshrl.u32 2102212464, %v203
        %v213 = vor.u32 %v211, %v212
        %v214 = vshll.u32 2102212464, %v202
        %v215 = vshrl.u32 920167782, %v203
        %v216 = vor.u32 %v214, %v215
        %v217 = vshll.u32 920167782, %v202
        %v218 = vshrl.u32 1326507024, %v203
        %v219 = vor.u32 %v217, %v218
        %vm220 = vcmp.lt.s32.totalorder %v201, 1
        %vm221 = vcmp.lt.s32.totalorder %v201, 2
        %vm222 = vcmp.lt.s32.totalorder %v201, 3
        %vm223 = vcmp.lt.s32.totalorder %v201, 4
        %v224 = vsel %vm220, %v204, %v207
        %v225 = vsel %vm223, %v213, 2102212464
        %v226 = vsel %vm222, %v210, %v225
        %v227 = vsel %vm221, %v224, %v226
        %v228 = vsel %vm220, %v207, %v210
        %v229 = vsel %vm223, %v216, 920167782
        %v230 = vsel %vm222, %v213, %v229
        %v231 = vsel %vm221, %v228, %v230
        %v232 = vsel %vm220, %v210, %v213
        %v233 = vsel %vm223, %v219, 1326507024
        %v234 = vsel %vm222, %v216, %v233
        %v235 = vsel %vm221, %v232, %v234
        %v236 = vshll.u32 %v196, 8
        %v237 = vmul.u32.u64.compose %v236, %v235
        %v238 = vextract.low.u32 %v237
        %v239 = vextract.high.u32 %v237
        %v240 = vmul.u32.u64.compose %v236, %v231
        %v241 = vextract.low.u32 %v240
        %v242 = vextract.high.u32 %v240
        %v243 = vmul.u32 %v236, %v227
        %v244 = vadd.s32 %v239, %v241
        %vm245 = vc.u32 %v239, %v241
        %v246 = vadd.s32 %v242, 1
        %v247 = vsel %vm245, %v246, %v242
        %v248 = vadd.s32 %v243, %v247
        %v249 = vadd.s32 %v248, 536870912
        %v250 = vshrl.u32 %v249, 30
        %v251 = vshll.u32 %v250, 30
        %v252 = vsub.s32 %v248, %v251
        %vm253 = vcmp.lt.s32.totalorder %v252, 0
        %v254 = vsub.s32 0, %v252
        %v255 = vsel %vm253, %v254, %v252
        %v256 = vclz %v255
        %v257 = vsub.s32 %v256, 2
        %vm258 = vcmp.gt.s32.totalorder 0, %v257
        %v259 = vsel %vm258, 0, %v257
        %v260 = vsub.s32 32, %v259
        %v261 = vshll.u32 %v252, %v259
        %v262 = vshrl.u32 %v244, %v260
        %v263 = vor.u32 %v261, %v262
        %v264 = vsub.s32 4294967266, %v259
        %v265 = vadd.s32 %v264, 127
        %v266 = vshll.u32 %v265, 23
        %v267 = vor.u32 4788187, %v266
        %v268 = vand.u32 2147483647, %v267
        %v270 = vcvt.s32.f32 %v263
        %v271 = vmul.f32 %v270, %v268
        %v272 = vxor.u32 %v271, 2147483648
        %v273 = vsel %vm190, %v272, %v271
        %v274 = vsub.s32 4, %v250
        %v275 = vsel %vm190, %v274, %v250
        %v276 = vsel %vm189, %v187, %v273
        %v277 = vsel %vm189, 0, %v275
        %v278 = vcosq.f32.pop %v276
        %v279 = vsinq.f32.pop %v276
        %vm280 = vweird.f32 %v187
        %v281 = vadd.s32 %v277, 3
        %v282 = vand.u32 %v281, 3
        %vm283 = vcmp.lt.s32.totalorder %v282, 2
        %vm284 = vcmp.eq.s32.totalorder %v282, 0
        %v285 = vxor.u32 %v279, 2147483648
        %v286 = vsel %vm284, %v278, %v285
        %vm287 = vcmp.eq.s32.totalorder %v282, 2
        %v288 = vxor.u32 %v278, 2147483648
        %v289 = vsel %vm287, %v288, %v279
        %v290 = vsel %vm283, %v286, %v289
        %v291 = vsel %vm280, nan, %v290
        %292 = vst [vmem:[%s161] sm:$0xff] %v291
        %s293 = sand.u32 %s93, 1
        %s294 = scalar_lea.sflag [#allocation3], %s293
        %s295 = sand.u32 %s93, 1
        %s296 = smul.addr %s295, 8
        %s297 = scalar_lea.vmem [#allocation2], %s296
        // Predicated region
        $region33: #{tpu_custom_call.1} parent=31 // pred_check
          %p298 = pneg %p103
        $region34: #{tpu_custom_call.1} parent=31 // pred_check_branch
          %300 = sbr.rel (%p298) target = $region36
        $region35: #{tpu_custom_call.1} parent=31 // pred_region
          %s302 = ssub.s32 128, 128
          %303 = vsyncadd %s294, %s302
          %s304 = smul.addr %s17, 128
          %s305 = scalar_lea.hbm %s3, %s304
          %s307 = sshll.u32 %s297, 4
          %s308 = int_to_ptr.vmem [resolvable:$true] %s307
          %310 = dma.vmem_to_hbm [thread:$0]  %s308, 128, %s305, %s294
        $region36: #{tpu_custom_call.1} parent=31 // pred_fallthru
          _
      $region32: #{tpu_custom_call.1} parent=5 // pred_fallthru
        _
      %p311 = scmp.le.s32.totalorder 2, %s12
      // Predicated region
      $region37: #{tpu_custom_call.1} parent=5 // pred_check
        %p312 = pneg %p311
      $region38: #{tpu_custom_call.1} parent=5 // pred_check_branch
        %314 = sbr.rel (%p312) target = $region40
      $region39: #{tpu_custom_call.1} parent=5 // pred_region
        %s315 = ssub.s32 %s12, 2
        // Predicated region
        $region41: #{tpu_custom_call.1} parent=39 // pred_check
          %p316 = pneg %p109
        $region42: #{tpu_custom_call.1} parent=39 // pred_check_branch
          %318 = sbr.rel (%p316) target = $region44
        $region43: #{tpu_custom_call.1} parent=39 // pred_region
          %s319 = sand.u32 %s94, 1
          %s320 = scalar_lea.sflag [#allocation3], %s319
          %s321 = sand.u32 %s94, 1
          %s322 = smul.addr %s321, 8
          %s323 = scalar_lea.vmem [#allocation2], %s322
          %324 = dma.done %s320, 128
        $region44: #{tpu_custom_call.1} parent=39 // pred_fallthru
          _
      $region40: #{tpu_custom_call.1} parent=5 // pred_fallthru
        _
    $region6: #{tpu_custom_call.1} parent=1 // loop_footer
      %s16 = sadd.s32 1, %s12
    $region7: #{tpu_custom_call.1} parent=1 // loop_footer_branch
      %11 = sbr.rel target = $region3
    $region8: #{tpu_custom_call.1} parent=1 // loop_exit
      _
    %325 = vsyncpa [#allocation3], 1
    %s326 = scalar_lea.sflag [#allocation3], 1
    %327 = vsyncpa %s326, 1

</llo_original>
